<compile_context>
chip_gen: v7x
topology: tpu7x:2x2x1
jax: 0.10.0
libtpu: 0.0.40
codegen_flags: <defaults>
</compile_context>

<pallas_src>
import functools

import jax
import jax.numpy as jnp
from jax.experimental import pallas as pl
from jax.experimental.pallas import tpu as pltpu

_MIB = 1024 * 1024


def _round_up(x, m):
    return ((x + m - 1) // m) * m


# ------------------------------ fused kernel --------------------------------
# grid = (M_tiles, I_tiles); j (intermediate tiles) is the down-proj reduction.
def fused_mlp_kernel(x_ref, wgu_ref, wd_ref, y_ref, acc_ref, *, tn):
    j = pl.program_id(1)

    x = x_ref[...]
    # One wide MXU pass for gate & up (shared LHS), full-K (hidden) contraction.
    gu = jnp.dot(x, wgu_ref[0], preferred_element_type=jnp.float32)
    g = gu[:, :tn]
    u = gu[:, tn:]
    # SiLU gating in fp32, narrowed to bf16 (stand-in for the original
    # activate_quantize_x narrowing) before the down projection.
    h = (g * jax.nn.sigmoid(g) * u).astype(wd_ref.dtype)
    partial = jnp.dot(h, wd_ref[0], preferred_element_type=jnp.float32)

    @pl.when(j == 0)
    def _():
        acc_ref[...] = partial          # first tile: direct write, no zero-fill

    @pl.when(j > 0)
    def _():
        acc_ref[...] += partial

    @pl.when(j == pl.num_programs(1) - 1)
    def _():
        y_ref[...] = acc_ref[...].astype(y_ref.dtype)


# ----------------------------- tile planning ---------------------------------
def _vmem_capacity_bytes():
    try:
        cap = getattr(pltpu.get_tpu_info(), "vmem_capacity_bytes", None)
        if cap:
            return int(cap)
    except Exception:
        pass
    return 64 * _MIB            # conservative default (v7x-sized VMEM)


def _generation_params():
    cap = _vmem_capacity_bytes()
    if cap >= 100 * _MIB:       # v5e / v6e: 128 MiB VMEM
        return dict(budget=96 * _MIB, vmem_limit=110 * _MIB,
                    weight_buf=3, tm_cap=1024)
    # v7x: 64 MiB physical VMEM
    return dict(budget=40 * _MIB, vmem_limit=56 * _MIB,
                weight_buf=2, tm_cap=512)


def _vmem_bytes(tm, tn, H, weight_buf):
    w = 3 * H * tn * 2 * weight_buf     # Wgu (H,2tn) + Wd (tn,H), N-buffered
    io = 2 * tm * H * 2 * 2             # x + y blocks, double-buffered
    acc = tm * H * 4                    # fp32 accumulator scratch
    return w + io + acc


def _choose_tn(H, I, budget, weight_buf, tm_cap):
    """Largest intermediate tile that fits the budget; prefer multiples of 256."""
    i_cap = _round_up(I, 128)
    tm_ref = min(256, tm_cap)
    for cand in (2048, 1024, 512, 256, 128):
        if cand > i_cap:
            continue
        if _vmem_bytes(tm_ref, cand, H, weight_buf) <= budget:
            return cand
    return 128                  # tm shrinks at call time to restore the budget


def _choose_tm(M, H, tn, budget, weight_buf, tm_cap):
    """Largest token tile <= tm_cap (and <= padded M) that fits the budget."""
    m_need = _round_up(M, 8)
    cands, c = [], 8
    while c < tm_cap:
        cands.append(c)
        c *= 2
    cands.append(tm_cap)
    cands = sorted({min(c, m_need) for c in cands}, reverse=True)
    for tm in cands:
        if _vmem_bytes(tm, tn, H, weight_buf) <= budget:
            return tm
    return cands[-1]            # smallest token tile; best effort


def _weight_block_spec(block_shape, index_map, depth):
    """Weight BlockSpec, optionally with a deeper DMA pipeline (v5e/v6e)."""
    if depth != 2:
        try:
            return pl.BlockSpec(block_shape, index_map,
                                pipeline_mode=pl.Buffered(depth))
        except TypeError:       # jax version without the pipeline_mode kwarg
            pass
    return pl.BlockSpec(block_shape, index_map)


# ------------------------------ host wrapper ---------------------------------
@functools.partial(jax.jit,
                   static_argnames=("tn", "tm", "weight_buf", "vmem_limit"))
def fused_mlp(x, wgu, wd, *, tn, tm, weight_buf, vmem_limit):
    """y = silu(x @ Wg) * (x @ Wu) @ Wd with tile-major fused weights.

    x:   (M, H) bf16
    wgu: (nI, H, 2*tn) bf16   -- per intermediate tile, [gate | up] columns
    wd:  (nI, tn, H)  bf16    -- per intermediate tile, down-proj rows
    """
    M, H = x.shape
    nI = wgu.shape[0]
    assert wgu.shape == (nI, H, 2 * tn) and wd.shape == (nI, tn, H)
    assert H % 128 == 0, "hidden_size must be a multiple of 128"

    # Pad tokens to a tile multiple (zero rows are inert in every projection).
    M_pad = _round_up(M, tm)
    if M_pad != M:
        x = jnp.pad(x, ((0, M_pad - M), (0, 0)))

    grid_m = M_pad // tm
    grid = (grid_m, nI)
    I_pad = nI * tn

    cost = pl.CostEstimate(
        flops=6 * M_pad * H * I_pad,                 # gate + up + down GEMMs
        transcendentals=M_pad * I_pad,               # sigmoid
        # Weights are re-streamed once per token tile.
        bytes_accessed=(grid_m * 3 * H * I_pad + 2 * M_pad * H) * 2,
    )

    y = pl.pallas_call(
        functools.partial(fused_mlp_kernel, tn=tn),
        out_shape=jax.ShapeDtypeStruct((M_pad, H), x.dtype),
        grid_spec=pltpu.PrefetchScalarGridSpec(
            num_scalar_prefetch=0,
            grid=grid,
            in_specs=[
                pl.BlockSpec((tm, H), lambda i, j: (i, 0)),               # x
                _weight_block_spec((1, H, 2 * tn), lambda i, j: (j, 0, 0),
                                   weight_buf),                           # Wgu
                _weight_block_spec((1, tn, H), lambda i, j: (j, 0, 0),
                                   weight_buf),                           # Wd
            ],
            out_specs=pl.BlockSpec((tm, H), lambda i, j: (i, 0)),
            scratch_shapes=[pltpu.VMEM((tm, H), jnp.float32)],
        ),
        compiler_params=pltpu.CompilerParams(
            # i (token tiles) is parallel (megacore-shardable for prefill);
            # j is the down-proj reduction, hence "arbitrary".
            dimension_semantics=("parallel", "arbitrary"),
            vmem_limit_bytes=vmem_limit,
        ),
        cost_estimate=cost,
    )(x, wgu, wd)

    if M_pad != M:
        y = y[:M]
    return y


class QLlamaMLPPallas:
    """JAX/Pallas re-implementation of QLlamaMLP's forward (mlp_bias=False).

    Weights are padded, gate/up-fused and re-laid-out ONCE at construction time
    into tile-major slabs, so no weight padding/transposition happens per call.
    """

    def __init__(self, hidden_size, intermediate_size, key):
        self.hidden_size = H = hidden_size
        self.intermediate_size = I = intermediate_size
        assert H % 128 == 0, "hidden_size must be a multiple of 128"

        gen = _generation_params()
        self.budget = gen["budget"]
        self.vmem_limit = gen["vmem_limit"]
        self.tm_cap = gen["tm_cap"]
        self.tn = _choose_tn(H, I, self.budget, gen["weight_buf"], self.tm_cap)

        kg, ku, kd = jax.random.split(key, 3)
        scale = 1.0 / jnp.sqrt(hidden_size)
        # Plain [in_features, out_features] weights (kept for the reference path).
        wg = (jax.random.normal(kg, (H, I), jnp.float32) * scale).astype(jnp.bfloat16)
        wu = (jax.random.normal(ku, (H, I), jnp.float32) * scale).astype(jnp.bfloat16)
        wd = (jax.random.normal(kd, (I, H), jnp.float32) * scale).astype(jnp.bfloat16)
        self.wg, self.wu, self.wd = wg, wu, wd

        # One-time pad of the intermediate dim (zeros are exact: silu(0)*0 == 0
        # and zero Wd rows contribute nothing), then tile-major re-layout.
        tn = self.tn
        I_pad = _round_up(I, tn)
        if I_pad != I:
            wg = jnp.pad(wg, ((0, 0), (0, I_pad - I)))
            wu = jnp.pad(wu, ((0, 0), (0, I_pad - I)))
            wd = jnp.pad(wd, ((0, I_pad - I), (0, 0)))
        nI = I_pad // tn
        wg_t = wg.reshape(H, nI, tn)
        wu_t = wu.reshape(H, nI, tn)
        # (nI, H, 2*tn): per tile, [gate | up] columns side by side.
        self.wgu_tiled = jnp.transpose(
            jnp.concatenate([wg_t, wu_t], axis=-1), (1, 0, 2))
        # (nI, tn, H): per tile, the matching down-proj rows (already contiguous).
        self.wd_tiled = wd.reshape(nI, tn, H)

        # Deeper weight pipelining only pays off when there are enough
        # intermediate tiles to hide DMA latency (and VMEM is plentiful).
        self.weight_buf = gen["weight_buf"] if nI >= 3 else 2

    def __call__(self, x):
        # x: (bsz, q_len, hidden) bf16
        bsz, q_len, H = x.shape
        M = bsz * q_len
        tm = _choose_tm(M, H, self.tn, self.budget, self.weight_buf, self.tm_cap)
        y2d = fused_mlp(x.reshape(M, H), self.wgu_tiled, self.wd_tiled,
                        tn=self.tn, tm=tm, weight_buf=self.weight_buf,
                        vmem_limit=self.vmem_limit)
        return y2d.reshape(bsz, q_len, -1)


def reference(x2d, wg, wu, wd):
    x32 = x2d.astype(jnp.float32)
    g = x32 @ wg.astype(jnp.float32)
    u = x32 @ wu.astype(jnp.float32)
    h = (g * jax.nn.sigmoid(g) * u).astype(jnp.bfloat16).astype(jnp.float32)
    return (h @ wd.astype(jnp.float32)).astype(jnp.bfloat16)


if __name__ == "__main__":
    key = jax.random.PRNGKey(0)
    k_x, k_w = jax.random.split(key)

    bsz, q_len = 2, 8
    hidden_size = 256
    intermediate_size = 512

    x = (jax.random.normal(k_x, (bsz, q_len, hidden_size), jnp.float32)
         * 0.5).astype(jnp.bfloat16)

    mlp = QLlamaMLPPallas(hidden_size, intermediate_size, k_w)

    y = jax.block_until_ready(mlp(x))

    assert y.shape == (bsz, q_len, hidden_size)
    assert y.dtype == jnp.bfloat16

    # sanity-check against a pure-JAX reference
    y_ref = reference(x.reshape(-1, hidden_size),
                      mlp.wg, mlp.wu, mlp.wd).reshape(bsz, q_len, -1)
    err = jnp.max(jnp.abs(y.astype(jnp.float32) - y_ref.astype(jnp.float32)))
    assert float(err) < 0.5, f"mismatch vs reference: {err}"

    print("KERNEL_OK")
</pallas_src>

<mosaic_0001>
module attributes {stable_mosaic.version = 11 : i64} {
  func.func @fused_mlp_kernel(%arg0: i32, %arg1: i32, %arg2: memref<16x256xbf16, #tpu.memory_space<vmem>>, %arg3: memref<1x256x1024xbf16, #tpu.memory_space<vmem>>, %arg4: memref<1x512x256xbf16, #tpu.memory_space<vmem>>, %arg5: memref<16x256xbf16, #tpu.memory_space<vmem>>, %arg6: memref<16x256xf32, #tpu.memory_space<vmem>>) attributes {dimension_semantics = [#tpu.dimension_semantics<parallel>, #tpu.dimension_semantics<arbitrary>], iteration_bounds = array<i64: 1, 1>, scalar_prefetch = 0 : i64, scratch_operands = 1 : i64, tpu.core_type = #tpu.core_type<tc>, window_params = [{transform_indices = @transform_0, window_bounds = array<i64: 16, 256>}, {transform_indices = @transform_1, window_bounds = array<i64: 1, 256, 1024>}, {transform_indices = @transform_2, window_bounds = array<i64: 1, 512, 256>}, {transform_indices = @transform_3, window_bounds = array<i64: 16, 256>}]} {
    %c0 = arith.constant 0 : index
    %c0_0 = arith.constant 0 : index
    %0 = vector.load %arg2[%c0, %c0_0] : memref<16x256xbf16, #tpu.memory_space<vmem>>, vector<16x256xbf16>
    %c0_1 = arith.constant 0 : index
    %c0_2 = arith.constant 0 : index
    %c0_3 = arith.constant 0 : index
    %1 = vector.load %arg3[%c0_1, %c0_2, %c0_3] : memref<1x256x1024xbf16, #tpu.memory_space<vmem>>, vector<1x256x1024xbf16>
    %2 = vector.shape_cast %1 : vector<1x256x1024xbf16> to vector<256x1024xbf16>
    %cst = arith.constant dense<0.000000e+00> : vector<16x1024xf32>
    %3 = tpu.matmul %0, %2, %cst {dimension_numbers = #tpu.dot_dimension_numbers<[1], [0], [0], [1], [0, 0, 1, 1], [], []>} : vector<16x256xbf16>, vector<256x1024xbf16>, vector<16x1024xf32> -> vector<16x1024xf32>
    %4 = vector.extract_strided_slice %3 {offsets = [0, 0], sizes = [16, 512], strides = [1, 1]} : vector<16x1024xf32> to vector<16x512xf32>
    %5 = vector.extract_strided_slice %3 {offsets = [0, 512], sizes = [16, 512], strides = [1, 1]} : vector<16x1024xf32> to vector<16x512xf32>
    %6 = arith.negf %4 : vector<16x512xf32>
    %7 = math.exp %6 : vector<16x512xf32>
    %cst_4 = arith.constant 1.000000e+00 : f32
    %8 = vector.broadcast %cst_4 : f32 to vector<16x512xf32>
    %9 = arith.addf %8, %7 : vector<16x512xf32>
    %10 = arith.divf %8, %9 : vector<16x512xf32>
    %11 = arith.mulf %4, %10 : vector<16x512xf32>
    %12 = arith.mulf %11, %5 : vector<16x512xf32>
    %13 = arith.truncf %12 : vector<16x512xf32> to vector<16x512xbf16>
    %c0_5 = arith.constant 0 : index
    %c0_6 = arith.constant 0 : index
    %c0_7 = arith.constant 0 : index
    %14 = vector.load %arg4[%c0_5, %c0_6, %c0_7] : memref<1x512x256xbf16, #tpu.memory_space<vmem>>, vector<1x512x256xbf16>
    %15 = vector.shape_cast %14 : vector<1x512x256xbf16> to vector<512x256xbf16>
    %cst_8 = arith.constant dense<0.000000e+00> : vector<16x256xf32>
    %16 = tpu.matmul %13, %15, %cst_8 {dimension_numbers = #tpu.dot_dimension_numbers<[1], [0], [0], [1], [0, 0, 1, 1], [], []>} : vector<16x512xbf16>, vector<512x256xbf16>, vector<16x256xf32> -> vector<16x256xf32>
    %c0_i32 = arith.constant 0 : i32
    %17 = arith.cmpi eq, %arg1, %c0_i32 : i32
    %18 = arith.extui %17 : i1 to i32
    %c0_i32_9 = arith.constant 0 : i32
    %19 = arith.cmpi ne, %18, %c0_i32_9 : i32
    scf.if %19 {
      %c0_14 = arith.constant 0 : index
      %c0_15 = arith.constant 0 : index
      %26 = vector.load %arg6[%c0_14, %c0_15] : memref<16x256xf32, #tpu.memory_space<vmem>>, vector<16x256xf32>
      tpu.vector_store %arg6[%c0_14, %c0_15], %16 {strides = array<i32>} : memref<16x256xf32, #tpu.memory_space<vmem>>, vector<16x256xf32>,
    } else {
    }
    %c0_i32_10 = arith.constant 0 : i32
    %20 = arith.cmpi sgt, %arg1, %c0_i32_10 : i32
    %21 = arith.extui %20 : i1 to i32
    %c0_i32_11 = arith.constant 0 : i32
    %22 = arith.cmpi ne, %21, %c0_i32_11 : i32
    scf.if %22 {
      %c0_14 = arith.constant 0 : index
      %c0_15 = arith.constant 0 : index
      %26 = vector.load %arg6[%c0_14, %c0_15] : memref<16x256xf32, #tpu.memory_space<vmem>>, vector<16x256xf32>
      %27 = arith.addf %26, %16 : vector<16x256xf32>
      %c0_16 = arith.constant 0 : index
      %c0_17 = arith.constant 0 : index
      %28 = vector.load %arg6[%c0_16, %c0_17] : memref<16x256xf32, #tpu.memory_space<vmem>>, vector<16x256xf32>
      tpu.vector_store %arg6[%c0_16, %c0_17], %27 {strides = array<i32>} : memref<16x256xf32, #tpu.memory_space<vmem>>, vector<16x256xf32>,
    } else {
    }
    %c0_i32_12 = arith.constant 0 : i32
    %23 = arith.cmpi eq, %arg1, %c0_i32_12 : i32
    %24 = arith.extui %23 : i1 to i32
    %c0_i32_13 = arith.constant 0 : i32
    %25 = arith.cmpi ne, %24, %c0_i32_13 : i32
    scf.if %25 {
      %c0_14 = arith.constant 0 : index
      %c0_15 = arith.constant 0 : index
      %26 = vector.load %arg6[%c0_14, %c0_15] : memref<16x256xf32, #tpu.memory_space<vmem>>, vector<16x256xf32>
      %27 = arith.truncf %26 : vector<16x256xf32> to vector<16x256xbf16>
      %c0_16 = arith.constant 0 : index
      %c0_17 = arith.constant 0 : index
      %28 = vector.load %arg5[%c0_16, %c0_17] : memref<16x256xbf16, #tpu.memory_space<vmem>>, vector<16x256xbf16>
      tpu.vector_store %arg5[%c0_16, %c0_17], %27 {strides = array<i32>} : memref<16x256xbf16, #tpu.memory_space<vmem>>, vector<16x256xbf16>,
    } else {
    }
    return
  }
  func.func @transform_0(%arg0: i32, %arg1: i32) -> (i32, i32) {
    %c0_i32 = arith.constant 0 : i32
    %c0_i32_0 = arith.constant 0 : i32
    return %arg0, %c0_i32 : i32, i32
  }
  func.func @transform_1(%arg0: i32, %arg1: i32) -> (i32, i32, i32) {
    %c0_i32 = arith.constant 0 : i32
    %c0_i32_0 = arith.constant 0 : i32
    %c0_i32_1 = arith.constant 0 : i32
    return %arg1, %c0_i32, %c0_i32_0 : i32, i32, i32
  }
  func.func @transform_2(%arg0: i32, %arg1: i32) -> (i32, i32, i32) {
    %c0_i32 = arith.constant 0 : i32
    %c0_i32_0 = arith.constant 0 : i32
    %c0_i32_1 = arith.constant 0 : i32
    return %arg1, %c0_i32, %c0_i32_0 : i32, i32, i32
  }
  func.func @transform_3(%arg0: i32, %arg1: i32) -> (i32, i32) {
    %c0_i32 = arith.constant 0 : i32
    %c0_i32_0 = arith.constant 0 : i32
    return %arg0, %c0_i32 : i32, i32
  }
}

</mosaic_0001>

<llo_original>
// kernel: fused_mlp.1
$region0: #{fused_mlp.1}
  #allocation0 [shape = 'u32[]', space=smem, size = 0x4, offset = 0x4, fixed_abs, tag = 'smem constant byte address 0x4 - core index']
  #allocation1 [shape = 'u32[144,128]{1,0:T(1,128)}', space=vmem, size = 0x12000, scoped, tag = 'internal scratch']
  #allocation2 [shape = 'f32[16,256]{1,0:T(8,128)}', space=vmem, size = 0x4000, scoped, tag = 'scratch operand']
  %s0 = inlined_call_operand.hbm [shape: bf16[16,256], index: 0, kind: input, shape index: {}]
  %s1 = inlined_call_operand.hbm [shape: bf16[1,256,1024], index: 1, kind: input, shape index: {}]
  %s2 = inlined_call_operand.hbm [shape: bf16[1,512,256], index: 2, kind: input, shape index: {}]
  %s3 = inlined_call_operand.hbm [shape: bf16[16,256], index: 3, kind: output, shape index: {}]
  %s4 = sld [smem:[#allocation0]]
  $region46: #{fused_mlp.1} parent=0
    _
  %s6 = ssub.s32 1, %s4
  %s7 = scalar_select 0, %s6, %s4
  $region1: #{fused_mlp.1} parent=0
    #allocation3 [shape = 'u8[8192]{0}', space=vmem, size = 0x2000, scoped, tag = 'input window, operand 0, single buffered']
    #allocation4 [shape = 's32[1]{0}', space=sflag, size = 0x4, scoped, tag = 'scoped memory for fused_mlp.1']
    #allocation5 [shape = 's32[1]{0}', space=sflag, size = 0x4, scoped, tag = 'scoped memory for fused_mlp.1']
    #allocation6 [shape = 'u8[524288]{0}', space=vmem, size = 0x80000, scoped, tag = 'input window, operand 1, single buffered']
    #allocation7 [shape = 's32[1]{0}', space=sflag, size = 0x4, scoped, tag = 'scoped memory for fused_mlp.1']
    #allocation8 [shape = 'u8[262144]{0}', space=vmem, size = 0x40000, scoped, tag = 'input window, operand 2, single buffered']
    #allocation9 [shape = 'u8[8192]{0}', space=vmem, size = 0x2000, scoped, tag = 'output window, operand 0, single buffered']
    %8 = vsyncpa [#allocation4], 0
    %9 = vsyncpa [#allocation7], 0
    %10 = vsyncpa [#allocation5], 0
    // Predicated region
    $region2: #{fused_mlp.1} parent=1 // pred_check
      _
    $region3: #{fused_mlp.1} parent=1 // pred_check_branch
      %12 = sbr.rel (0) target = $region5
    $region4: #{fused_mlp.1} parent=1 // pred_region
      %s14 = ssub.s32 256, 256
      %15 = vsyncadd [#allocation4], %s14
      %s16 = sshll.u32 [#allocation3], 4
      %s17 = int_to_ptr.vmem [resolvable:$true] %s16
      %22 = dma.hbm_to_vmem [thread:$0]  %s0, 256, %s17, [#allocation4], 128, 128, 8
    $region5: #{fused_mlp.1} parent=1 // pred_fallthru
      _
    // Predicated region
    $region6: #{fused_mlp.1} parent=1 // pred_check
      _
    $region7: #{fused_mlp.1} parent=1 // pred_check_branch
      %24 = sbr.rel (0) target = $region9
    $region8: #{fused_mlp.1} parent=1 // pred_region
      %s26 = ssub.s32 16384, 16384
      %27 = vsyncadd [#allocation7], %s26
      %s28 = sshll.u32 [#allocation6], 4
      %s29 = int_to_ptr.vmem [resolvable:$true] %s28
      %34 = dma.hbm_to_vmem [thread:$0]  %s1, 16384, %s29, [#allocation7], 512, 512, 32
    $region9: #{fused_mlp.1} parent=1 // pred_fallthru
      _
    // Predicated region
    $region10: #{fused_mlp.1} parent=1 // pred_check
      _
    $region11: #{fused_mlp.1} parent=1 // pred_check_branch
      %36 = sbr.rel (0) target = $region13
    $region12: #{fused_mlp.1} parent=1 // pred_region
      %s38 = ssub.s32 8192, 8192
      %39 = vsyncadd [#allocation7], %s38
      %s40 = sshll.u32 [#allocation8], 4
      %s41 = int_to_ptr.vmem [resolvable:$true] %s40
      %46 = dma.hbm_to_vmem [thread:$0]  %s2, 8192, %s41, [#allocation7], 128, 128, 8
    $region13: #{fused_mlp.1} parent=1 // pred_fallthru
      _
    // Predicated region
    $region14: #{fused_mlp.1} parent=1 // pred_check
      _
    $region15: #{fused_mlp.1} parent=1 // pred_check_branch
      %48 = sbr.rel (0) target = $region17
    $region16: #{fused_mlp.1} parent=1 // pred_region
      %49 = dma.done [#allocation4], 256
    $region17: #{fused_mlp.1} parent=1 // pred_fallthru
      _
    // Predicated region
    $region18: #{fused_mlp.1} parent=1 // pred_check
      _
    $region19: #{fused_mlp.1} parent=1 // pred_check_branch
      %51 = sbr.rel (0) target = $region21
    $region20: #{fused_mlp.1} parent=1 // pred_region
      %52 = dma.done [#allocation7], 16384
    $region21: #{fused_mlp.1} parent=1 // pred_fallthru
      _
    // Predicated region
    $region22: #{fused_mlp.1} parent=1 // pred_check
      _
    $region23: #{fused_mlp.1} parent=1 // pred_check_branch
      %54 = sbr.rel (0) target = $region25
    $region24: #{fused_mlp.1} parent=1 // pred_region
      %55 = dma.done [#allocation7], 8192
    $region25: #{fused_mlp.1} parent=1 // pred_fallthru
      _
    %v56 = vld [vmem:[#allocation3] sm:$0xff]
    %v57 = vld [vmem:[#allocation3 + $0x8] sm:$0xff]
    %v58 = vld [vmem:[#allocation6] sm:$0xff]
    %v59 = vld [vmem:[#allocation6 + $0x8] sm:$0xff]
    %v60 = vld [vmem:[#allocation6 + $0x10] sm:$0xff]
    %v61 = vld [vmem:[#allocation6 + $0x18] sm:$0xff]
    %v62 = vld [vmem:[#allocation6 + $0x20] sm:$0xff]
    %v63 = vld [vmem:[#allocation6 + $0x28] sm:$0xff]
    %v64 = vld [vmem:[#allocation6 + $0x30] sm:$0xff]
    %v65 = vld [vmem:[#allocation6 + $0x38] sm:$0xff]
    %v66 = vld [vmem:[#allocation6 + $0x40] sm:$0xff]
    %v67 = vld [vmem:[#allocation6 + $0x48] sm:$0xff]
    %v68 = vld [vmem:[#allocation6 + $0x50] sm:$0xff]
    %v69 = vld [vmem:[#allocation6 + $0x58] sm:$0xff]
    %v70 = vld [vmem:[#allocation6 + $0x60] sm:$0xff]
    %v71 = vld [vmem:[#allocation6 + $0x68] sm:$0xff]
    %v72 = vld [vmem:[#allocation6 + $0x70] sm:$0xff]
    %v73 = vld [vmem:[#allocation6 + $0x78] sm:$0xff]
    %v74 = vld [vmem:[#allocation6 + $0x80] sm:$0xff]
    %v75 = vld [vmem:[#allocation6 + $0x88] sm:$0xff]
    %v76 = vld [vmem:[#allocation6 + $0x90] sm:$0xff]
    %v77 = vld [vmem:[#allocation6 + $0x98] sm:$0xff]
    %v78 = vld [vmem:[#allocation6 + $0xa0] sm:$0xff]
    %v79 = vld [vmem:[#allocation6 + $0xa8] sm:$0xff]
    %v80 = vld [vmem:[#allocation6 + $0xb0] sm:$0xff]
    %v81 = vld [vmem:[#allocation6 + $0xb8] sm:$0xff]
    %v82 = vld [vmem:[#allocation6 + $0xc0] sm:$0xff]
    %v83 = vld [vmem:[#allocation6 + $0xc8] sm:$0xff]
    %v84 = vld [vmem:[#allocation6 + $0xd0] sm:$0xff]
    %v85 = vld [vmem:[#allocation6 + $0xd8] sm:$0xff]
    %v86 = vld [vmem:[#allocation6 + $0xe0] sm:$0xff]
    %v87 = vld [vmem:[#allocation6 + $0xe8] sm:$0xff]
    %v88 = vld [vmem:[#allocation6 + $0xf0] sm:$0xff]
    %v89 = vld [vmem:[#allocation6 + $0xf8] sm:$0xff]
    %v90 = vld [vmem:[#allocation6 + $0x100] sm:$0xff]
    %v91 = vld [vmem:[#allocation6 + $0x108] sm:$0xff]
    %v92 = vld [vmem:[#allocation6 + $0x110] sm:$0xff]
    %v93 = vld [vmem:[#allocation6 + $0x118] sm:$0xff]
    %v94 = vld [vmem:[#allocation6 + $0x120] sm:$0xff]
    %v95 = vld [vmem:[#allocation6 + $0x128] sm:$0xff]
    %v96 = vld [vmem:[#allocation6 + $0x130] sm:$0xff]
    %v97 = vld [vmem:[#allocation6 + $0x138] sm:$0xff]
    %v98 = vld [vmem:[#allocation6 + $0x140] sm:$0xff]
    %v99 = vld [vmem:[#allocation6 + $0x148] sm:$0xff]
    %v100 = vld [vmem:[#allocation6 + $0x150] sm:$0xff]
    %v101 = vld [vmem:[#allocation6 + $0x158] sm:$0xff]
    %v102 = vld [vmem:[#allocation6 + $0x160] sm:$0xff]
    %v103 = vld [vmem:[#allocation6 + $0x168] sm:$0xff]
    %v104 = vld [vmem:[#allocation6 + $0x170] sm:$0xff]
    %v105 = vld [vmem:[#allocation6 + $0x178] sm:$0xff]
    %v106 = vld [vmem:[#allocation6 + $0x180] sm:$0xff]
    %v107 = vld [vmem:[#allocation6 + $0x188] sm:$0xff]
    %v108 = vld [vmem:[#allocation6 + $0x190] sm:$0xff]
    %v109 = vld [vmem:[#allocation6 + $0x198] sm:$0xff]
    %v110 = vld [vmem:[#allocation6 + $0x1a0] sm:$0xff]
    %v111 = vld [vmem:[#allocation6 + $0x1a8] sm:$0xff]
    %v112 = vld [vmem:[#allocation6 + $0x1b0] sm:$0xff]
    %v113 = vld [vmem:[#allocation6 + $0x1b8] sm:$0xff]
    %v114 = vld [vmem:[#allocation6 + $0x1c0] sm:$0xff]
    %v115 = vld [vmem:[#allocation6 + $0x1c8] sm:$0xff]
    %v116 = vld [vmem:[#allocation6 + $0x1d0] sm:$0xff]
    %v117 = vld [vmem:[#allocation6 + $0x1d8] sm:$0xff]
    %v118 = vld [vmem:[#allocation6 + $0x1e0] sm:$0xff]
    %v119 = vld [vmem:[#allocation6 + $0x1e8] sm:$0xff]
    %v120 = vld [vmem:[#allocation6 + $0x1f0] sm:$0xff]
    %v121 = vld [vmem:[#allocation6 + $0x1f8] sm:$0xff]
    %v122 = vld [vmem:[#allocation6 + $0x200] sm:$0xff]
    %v123 = vld [vmem:[#allocation6 + $0x208] sm:$0xff]
    %v124 = vld [vmem:[#allocation6 + $0x210] sm:$0xff]
    %v125 = vld [vmem:[#allocation6 + $0x218] sm:$0xff]
    %v126 = vld [vmem:[#allocation6 + $0x220] sm:$0xff]
    %v127 = vld [vmem:[#allocation6 + $0x228] sm:$0xff]
    %v128 = vld [vmem:[#allocation6 + $0x230] sm:$0xff]
    %v129 = vld [vmem:[#allocation6 + $0x238] sm:$0xff]
    %v130 = vld [vmem:[#allocation6 + $0x240] sm:$0xff]
    %v131 = vld [vmem:[#allocation6 + $0x248] sm:$0xff]
    %v132 = vld [vmem:[#allocation6 + $0x250] sm:$0xff]
    %v133 = vld [vmem:[#allocation6 + $0x258] sm:$0xff]
    %v134 = vld [vmem:[#allocation6 + $0x260] sm:$0xff]
    %v135 = vld [vmem:[#allocation6 + $0x268] sm:$0xff]
    %v136 = vld [vmem:[#allocation6 + $0x270] sm:$0xff]
    %v137 = vld [vmem:[#allocation6 + $0x278] sm:$0xff]
    %v138 = vld [vmem:[#allocation6 + $0x280] sm:$0xff]
    %v139 = vld [vmem:[#allocation6 + $0x288] sm:$0xff]
    %v140 = vld [vmem:[#allocation6 + $0x290] sm:$0xff]
    %v141 = vld [vmem:[#allocation6 + $0x298] sm:$0xff]
    %v142 = vld [vmem:[#allocation6 + $0x2a0] sm:$0xff]
    %v143 = vld [vmem:[#allocation6 + $0x2a8] sm:$0xff]
    %v144 = vld [vmem:[#allocation6 + $0x2b0] sm:$0xff]
    %v145 = vld [vmem:[#allocation6 + $0x2b8] sm:$0xff]
    %v146 = vld [vmem:[#allocation6 + $0x2c0] sm:$0xff]
    %v147 = vld [vmem:[#allocation6 + $0x2c8] sm:$0xff]
    %v148 = vld [vmem:[#allocation6 + $0x2d0] sm:$0xff]
    %v149 = vld [vmem:[#allocation6 + $0x2d8] sm:$0xff]
    %v150 = vld [vmem:[#allocation6 + $0x2e0] sm:$0xff]
    %v151 = vld [vmem:[#allocation6 + $0x2e8] sm:$0xff]
    %v152 = vld [vmem:[#allocation6 + $0x2f0] sm:$0xff]
    %v153 = vld [vmem:[#allocation6 + $0x2f8] sm:$0xff]
    %v154 = vld [vmem:[#allocation6 + $0x300] sm:$0xff]
    %v155 = vld [vmem:[#allocation6 + $0x308] sm:$0xff]
    %v156 = vld [vmem:[#allocation6 + $0x310] sm:$0xff]
    %v157 = vld [vmem:[#allocation6 + $0x318] sm:$0xff]
    %v158 = vld [vmem:[#allocation6 + $0x320] sm:$0xff]
    %v159 = vld [vmem:[#allocation6 + $0x328] sm:$0xff]
    %v160 = vld [vmem:[#allocation6 + $0x330] sm:$0xff]
    %v161 = vld [vmem:[#allocation6 + $0x338] sm:$0xff]
    %v162 = vld [vmem:[#allocation6 + $0x340] sm:$0xff]
    %v163 = vld [vmem:[#allocation6 + $0x348] sm:$0xff]
    %v164 = vld [vmem:[#allocation6 + $0x350] sm:$0xff]
    %v165 = vld [vmem:[#allocation6 + $0x358] sm:$0xff]
    %v166 = vld [vmem:[#allocation6 + $0x360] sm:$0xff]
    %v167 = vld [vmem:[#allocation6 + $0x368] sm:$0xff]
    %v168 = vld [vmem:[#allocation6 + $0x370] sm:$0xff]
    %v169 = vld [vmem:[#allocation6 + $0x378] sm:$0xff]
    %v170 = vld [vmem:[#allocation6 + $0x380] sm:$0xff]
    %v171 = vld [vmem:[#allocation6 + $0x388] sm:$0xff]
    %v172 = vld [vmem:[#allocation6 + $0x390] sm:$0xff]
    %v173 = vld [vmem:[#allocation6 + $0x398] sm:$0xff]
    %v174 = vld [vmem:[#allocation6 + $0x3a0] sm:$0xff]
    %v175 = vld [vmem:[#allocation6 + $0x3a8] sm:$0xff]
    %v176 = vld [vmem:[#allocation6 + $0x3b0] sm:$0xff]
    %v177 = vld [vmem:[#allocation6 + $0x3b8] sm:$0xff]
    %v178 = vld [vmem:[#allocation6 + $0x3c0] sm:$0xff]
    %v179 = vld [vmem:[#allocation6 + $0x3c8] sm:$0xff]
    %v180 = vld [vmem:[#allocation6 + $0x3d0] sm:$0xff]
    %v181 = vld [vmem:[#allocation6 + $0x3d8] sm:$0xff]
    %v182 = vld [vmem:[#allocation6 + $0x3e0] sm:$0xff]
    %v183 = vld [vmem:[#allocation6 + $0x3e8] sm:$0xff]
    %v184 = vld [vmem:[#allocation6 + $0x3f0] sm:$0xff]
    %v185 = vld [vmem:[#allocation6 + $0x3f8] sm:$0xff]
    %v188 = vunpack.c.l.b16 %v56
    %v189 = vunpack.c.h.b16 %v56
    %v190 = vunpack.c.l.b16 %v57
    %v191 = vunpack.c.h.b16 %v57
    %v192 = vpack.c.b16 %v190, %v188
    %v193 = vpack.c.b16 %v191, %v189
    %v324 = vunpack.c.l.b16 %v58
    %v325 = vunpack.c.h.b16 %v58
    %v326 = vunpack.c.l.b16 %v59
    %v327 = vunpack.c.h.b16 %v59
    %v328 = vunpack.c.l.b16 %v60
    %v329 = vunpack.c.h.b16 %v60
    %v330 = vunpack.c.l.b16 %v61
    %v331 = vunpack.c.h.b16 %v61
    %v332 = vunpack.c.l.b16 %v62
    %v333 = vunpack.c.h.b16 %v62
    %v334 = vunpack.c.l.b16 %v63
    %v335 = vunpack.c.h.b16 %v63
    %v336 = vunpack.c.l.b16 %v64
    %v337 = vunpack.c.h.b16 %v64
    %v338 = vunpack.c.l.b16 %v65
    %v339 = vunpack.c.h.b16 %v65
    %v340 = vunpack.c.l.b16 %v66
    %v341 = vunpack.c.h.b16 %v66
    %v342 = vunpack.c.l.b16 %v67
    %v343 = vunpack.c.h.b16 %v67
    %v344 = vunpack.c.l.b16 %v68
    %v345 = vunpack.c.h.b16 %v68
    %v346 = vunpack.c.l.b16 %v69
    %v347 = vunpack.c.h.b16 %v69
    %v348 = vunpack.c.l.b16 %v70
    %v349 = vunpack.c.h.b16 %v70
    %v350 = vunpack.c.l.b16 %v71
    %v351 = vunpack.c.h.b16 %v71
    %v352 = vunpack.c.l.b16 %v72
    %v353 = vunpack.c.h.b16 %v72
    %v354 = vunpack.c.l.b16 %v73
    %v355 = vunpack.c.h.b16 %v73
    %v356 = vunpack.c.l.b16 %v74
    %v357 = vunpack.c.h.b16 %v74
    %v358 = vunpack.c.l.b16 %v75
    %v359 = vunpack.c.h.b16 %v75
    %v360 = vunpack.c.l.b16 %v76
    %v361 = vunpack.c.h.b16 %v76
    %v362 = vunpack.c.l.b16 %v77
    %v363 = vunpack.c.h.b16 %v77
    %v364 = vunpack.c.l.b16 %v78
    %v365 = vunpack.c.h.b16 %v78
    %v366 = vunpack.c.l.b16 %v79
    %v367 = vunpack.c.h.b16 %v79
    %v368 = vunpack.c.l.b16 %v80
    %v369 = vunpack.c.h.b16 %v80
    %v370 = vunpack.c.l.b16 %v81
    %v371 = vunpack.c.h.b16 %v81
    %v372 = vunpack.c.l.b16 %v82
    %v373 = vunpack.c.h.b16 %v82
    %v374 = vunpack.c.l.b16 %v83
    %v375 = vunpack.c.h.b16 %v83
    %v376 = vunpack.c.l.b16 %v84
    %v377 = vunpack.c.h.b16 %v84
    %v378 = vunpack.c.l.b16 %v85
    %v379 = vunpack.c.h.b16 %v85
    %v380 = vunpack.c.l.b16 %v86
    %v381 = vunpack.c.h.b16 %v86
    %v382 = vunpack.c.l.b16 %v87
    %v383 = vunpack.c.h.b16 %v87
    %v384 = vunpack.c.l.b16 %v88
    %v385 = vunpack.c.h.b16 %v88
    %v386 = vunpack.c.l.b16 %v89
    %v387 = vunpack.c.h.b16 %v89
    %v388 = vunpack.c.l.b16 %v90
    %v389 = vunpack.c.h.b16 %v90
    %v390 = vunpack.c.l.b16 %v91
    %v391 = vunpack.c.h.b16 %v91
    %v392 = vunpack.c.l.b16 %v92
    %v393 = vunpack.c.h.b16 %v92
    %v394 = vunpack.c.l.b16 %v93
    %v395 = vunpack.c.h.b16 %v93
    %v396 = vunpack.c.l.b16 %v94
    %v397 = vunpack.c.h.b16 %v94
    %v398 = vunpack.c.l.b16 %v95
    %v399 = vunpack.c.h.b16 %v95
    %v400 = vunpack.c.l.b16 %v96
    %v401 = vunpack.c.h.b16 %v96
    %v402 = vunpack.c.l.b16 %v97
    %v403 = vunpack.c.h.b16 %v97
    %v404 = vunpack.c.l.b16 %v98
    %v405 = vunpack.c.h.b16 %v98
    %v406 = vunpack.c.l.b16 %v99
    %v407 = vunpack.c.h.b16 %v99
    %v408 = vunpack.c.l.b16 %v100
    %v409 = vunpack.c.h.b16 %v100
    %v410 = vunpack.c.l.b16 %v101
    %v411 = vunpack.c.h.b16 %v101
    %v412 = vunpack.c.l.b16 %v102
    %v413 = vunpack.c.h.b16 %v102
    %v414 = vunpack.c.l.b16 %v103
    %v415 = vunpack.c.h.b16 %v103
    %v416 = vunpack.c.l.b16 %v104
    %v417 = vunpack.c.h.b16 %v104
    %v418 = vunpack.c.l.b16 %v105
    %v419 = vunpack.c.h.b16 %v105
    %v420 = vunpack.c.l.b16 %v106
    %v421 = vunpack.c.h.b16 %v106
    %v422 = vunpack.c.l.b16 %v107
    %v423 = vunpack.c.h.b16 %v107
    %v424 = vunpack.c.l.b16 %v108
    %v425 = vunpack.c.h.b16 %v108
    %v426 = vunpack.c.l.b16 %v109
    %v427 = vunpack.c.h.b16 %v109
    %v428 = vunpack.c.l.b16 %v110
    %v429 = vunpack.c.h.b16 %v110
    %v430 = vunpack.c.l.b16 %v111
    %v431 = vunpack.c.h.b16 %v111
    %v432 = vunpack.c.l.b16 %v112
    %v433 = vunpack.c.h.b16 %v112
    %v434 = vunpack.c.l.b16 %v113
    %v435 = vunpack.c.h.b16 %v113
    %v436 = vunpack.c.l.b16 %v114
    %v437 = vunpack.c.h.b16 %v114
    %v438 = vunpack.c.l.b16 %v115
    %v439 = vunpack.c.h.b16 %v115
    %v440 = vunpack.c.l.b16 %v116
    %v441 = vunpack.c.h.b16 %v116
    %v442 = vunpack.c.l.b16 %v117
    %v443 = vunpack.c.h.b16 %v117
    %v444 = vunpack.c.l.b16 %v118
    %v445 = vunpack.c.h.b16 %v118
    %v446 = vunpack.c.l.b16 %v119
    %v447 = vunpack.c.h.b16 %v119
    %v448 = vunpack.c.l.b16 %v120
    %v449 = vunpack.c.h.b16 %v120
    %v450 = vunpack.c.l.b16 %v121
    %v451 = vunpack.c.h.b16 %v121
    %v452 = vunpack.c.l.b16 %v122
    %v453 = vunpack.c.h.b16 %v122
    %v454 = vunpack.c.l.b16 %v123
    %v455 = vunpack.c.h.b16 %v123
    %v456 = vunpack.c.l.b16 %v124
    %v457 = vunpack.c.h.b16 %v124
    %v458 = vunpack.c.l.b16 %v125
    %v459 = vunpack.c.h.b16 %v125
    %v460 = vunpack.c.l.b16 %v126
    %v461 = vunpack.c.h.b16 %v126
    %v462 = vunpack.c.l.b16 %v127
    %v463 = vunpack.c.h.b16 %v127
    %v464 = vunpack.c.l.b16 %v128
    %v465 = vunpack.c.h.b16 %v128
    %v466 = vunpack.c.l.b16 %v129
    %v467 = vunpack.c.h.b16 %v129
    %v468 = vunpack.c.l.b16 %v130
    %v469 = vunpack.c.h.b16 %v130
    %v470 = vunpack.c.l.b16 %v131
    %v471 = vunpack.c.h.b16 %v131
    %v472 = vunpack.c.l.b16 %v132
    %v473 = vunpack.c.h.b16 %v132
    %v474 = vunpack.c.l.b16 %v133
    %v475 = vunpack.c.h.b16 %v133
    %v476 = vunpack.c.l.b16 %v134
    %v477 = vunpack.c.h.b16 %v134
    %v478 = vunpack.c.l.b16 %v135
    %v479 = vunpack.c.h.b16 %v135
    %v480 = vunpack.c.l.b16 %v136
    %v481 = vunpack.c.h.b16 %v136
    %v482 = vunpack.c.l.b16 %v137
    %v483 = vunpack.c.h.b16 %v137
    %v484 = vunpack.c.l.b16 %v138
    %v485 = vunpack.c.h.b16 %v138
    %v486 = vunpack.c.l.b16 %v139
    %v487 = vunpack.c.h.b16 %v139
    %v488 = vunpack.c.l.b16 %v140
    %v489 = vunpack.c.h.b16 %v140
    %v490 = vunpack.c.l.b16 %v141
    %v491 = vunpack.c.h.b16 %v141
    %v492 = vunpack.c.l.b16 %v142
    %v493 = vunpack.c.h.b16 %v142
    %v494 = vunpack.c.l.b16 %v143
    %v495 = vunpack.c.h.b16 %v143
    %v496 = vunpack.c.l.b16 %v144
    %v497 = vunpack.c.h.b16 %v144
    %v498 = vunpack.c.l.b16 %v145
    %v499 = vunpack.c.h.b16 %v145
    %v500 = vunpack.c.l.b16 %v146
    %v501 = vunpack.c.h.b16 %v146
    %v502 = vunpack.c.l.b16 %v147
    %v503 = vunpack.c.h.b16 %v147
    %v504 = vunpack.c.l.b16 %v148
    %v505 = vunpack.c.h.b16 %v148
    %v506 = vunpack.c.l.b16 %v149
    %v507 = vunpack.c.h.b16 %v149
    %v508 = vunpack.c.l.b16 %v150
    %v509 = vunpack.c.h.b16 %v150
    %v510 = vunpack.c.l.b16 %v151
    %v511 = vunpack.c.h.b16 %v151
    %v512 = vunpack.c.l.b16 %v152
    %v513 = vunpack.c.h.b16 %v152
    %v514 = vunpack.c.l.b16 %v153
    %v515 = vunpack.c.h.b16 %v153
    %v516 = vunpack.c.l.b16 %v154
    %v517 = vunpack.c.h.b16 %v154
    %v518 = vunpack.c.l.b16 %v155
    %v519 = vunpack.c.h.b16 %v155
    %v520 = vunpack.c.l.b16 %v156
    %v521 = vunpack.c.h.b16 %v156
    %v522 = vunpack.c.l.b16 %v157
    %v523 = vunpack.c.h.b16 %v157
    %v524 = vunpack.c.l.b16 %v158
    %v525 = vunpack.c.h.b16 %v158
    %v526 = vunpack.c.l.b16 %v159
    %v527 = vunpack.c.h.b16 %v159
    %v528 = vunpack.c.l.b16 %v160
    %v529 = vunpack.c.h.b16 %v160
    %v530 = vunpack.c.l.b16 %v161
    %v531 = vunpack.c.h.b16 %v161
    %v532 = vunpack.c.l.b16 %v162
    %v533 = vunpack.c.h.b16 %v162
    %v534 = vunpack.c.l.b16 %v163
    %v535 = vunpack.c.h.b16 %v163
    %v536 = vunpack.c.l.b16 %v164
    %v537 = vunpack.c.h.b16 %v164
    %v538 = vunpack.c.l.b16 %v165
    %v539 = vunpack.c.h.b16 %v165
    %v540 = vunpack.c.l.b16 %v166
    %v541 = vunpack.c.h.b16 %v166
    %v542 = vunpack.c.l.b16 %v167
    %v543 = vunpack.c.h.b16 %v167
    %v544 = vunpack.c.l.b16 %v168
    %v545 = vunpack.c.h.b16 %v168
    %v546 = vunpack.c.l.b16 %v169
    %v547 = vunpack.c.h.b16 %v169
    %v548 = vunpack.c.l.b16 %v170
    %v549 = vunpack.c.h.b16 %v170
    %v550 = vunpack.c.l.b16 %v171
    %v551 = vunpack.c.h.b16 %v171
    %v552 = vunpack.c.l.b16 %v172
    %v553 = vunpack.c.h.b16 %v172
    %v554 = vunpack.c.l.b16 %v173
    %v555 = vunpack.c.h.b16 %v173
    %v556 = vunpack.c.l.b16 %v174
    %v557 = vunpack.c.h.b16 %v174
    %v558 = vunpack.c.l.b16 %v175
    %v559 = vunpack.c.h.b16 %v175
    %v560 = vunpack.c.l.b16 %v176
    %v561 = vunpack.c.h.b16 %v176
    %v562 = vunpack.c.l.b16 %v177
    %v563 = vunpack.c.h.b16 %v177
    %v564 = vunpack.c.l.b16 %v178
    %v565 = vunpack.c.h.b16 %v178
    %v566 = vunpack.c.l.b16 %v179
    %v567 = vunpack.c.h.b16 %v179
    %v568 = vunpack.c.l.b16 %v180
    %v569 = vunpack.c.h.b16 %v180
    %v570 = vunpack.c.l.b16 %v181
    %v571 = vunpack.c.h.b16 %v181
    %v572 = vunpack.c.l.b16 %v182
    %v573 = vunpack.c.h.b16 %v182
    %v574 = vunpack.c.l.b16 %v183
    %v575 = vunpack.c.h.b16 %v183
    %v576 = vunpack.c.l.b16 %v184
    %v577 = vunpack.c.h.b16 %v184
    %v578 = vunpack.c.l.b16 %v185
    %v579 = vunpack.c.h.b16 %v185
    %v580 = vpack.c.b16 %v332, %v324
    %v581 = vpack.c.b16 %v333, %v325
    %v582 = vpack.c.b16 %v334, %v326
    %v583 = vpack.c.b16 %v335, %v327
    %v584 = vpack.c.b16 %v336, %v328
    %v585 = vpack.c.b16 %v337, %v329
    %v586 = vpack.c.b16 %v338, %v330
    %v587 = vpack.c.b16 %v339, %v331
    %v588 = vpack.c.b16 %v348, %v340
    %v589 = vpack.c.b16 %v349, %v341
    %v590 = vpack.c.b16 %v350, %v342
    %v591 = vpack.c.b16 %v351, %v343
    %v592 = vpack.c.b16 %v352, %v344
    %v593 = vpack.c.b16 %v353, %v345
    %v594 = vpack.c.b16 %v354, %v346
    %v595 = vpack.c.b16 %v355, %v347
    %v596 = vpack.c.b16 %v364, %v356
    %v597 = vpack.c.b16 %v365, %v357
    %v598 = vpack.c.b16 %v366, %v358
    %v599 = vpack.c.b16 %v367, %v359
    %v600 = vpack.c.b16 %v368, %v360
    %v601 = vpack.c.b16 %v369, %v361
    %v602 = vpack.c.b16 %v370, %v362
    %v603 = vpack.c.b16 %v371, %v363
    %v604 = vpack.c.b16 %v380, %v372
    %v605 = vpack.c.b16 %v381, %v373
    %v606 = vpack.c.b16 %v382, %v374
    %v607 = vpack.c.b16 %v383, %v375
    %v608 = vpack.c.b16 %v384, %v376
    %v609 = vpack.c.b16 %v385, %v377
    %v610 = vpack.c.b16 %v386, %v378
    %v611 = vpack.c.b16 %v387, %v379
    %v612 = vpack.c.b16 %v396, %v388
    %v613 = vpack.c.b16 %v397, %v389
    %v614 = vpack.c.b16 %v398, %v390
    %v615 = vpack.c.b16 %v399, %v391
    %v616 = vpack.c.b16 %v400, %v392
    %v617 = vpack.c.b16 %v401, %v393
    %v618 = vpack.c.b16 %v402, %v394
    %v619 = vpack.c.b16 %v403, %v395
    %v620 = vpack.c.b16 %v412, %v404
    %v621 = vpack.c.b16 %v413, %v405
    %v622 = vpack.c.b16 %v414, %v406
    %v623 = vpack.c.b16 %v415, %v407
    %v624 = vpack.c.b16 %v416, %v408
    %v625 = vpack.c.b16 %v417, %v409
    %v626 = vpack.c.b16 %v418, %v410
    %v627 = vpack.c.b16 %v419, %v411
    %v628 = vpack.c.b16 %v428, %v420
    %v629 = vpack.c.b16 %v429, %v421
    %v630 = vpack.c.b16 %v430, %v422
    %v631 = vpack.c.b16 %v431, %v423
    %v632 = vpack.c.b16 %v432, %v424
    %v633 = vpack.c.b16 %v433, %v425
    %v634 = vpack.c.b16 %v434, %v426
    %v635 = vpack.c.b16 %v435, %v427
    %v636 = vpack.c.b16 %v444, %v436
    %v637 = vpack.c.b16 %v445, %v437
    %v638 = vpack.c.b16 %v446, %v438
    %v639 = vpack.c.b16 %v447, %v439
    %v640 = vpack.c.b16 %v448, %v440
    %v641 = vpack.c.b16 %v449, %v441
    %v642 = vpack.c.b16 %v450, %v442
    %v643 = vpack.c.b16 %v451, %v443
    %v644 = vpack.c.b16 %v460, %v452
    %v645 = vpack.c.b16 %v461, %v453
    %v646 = vpack.c.b16 %v462, %v454
    %v647 = vpack.c.b16 %v463, %v455
    %v648 = vpack.c.b16 %v464, %v456
    %v649 = vpack.c.b16 %v465, %v457
    %v650 = vpack.c.b16 %v466, %v458
    %v651 = vpack.c.b16 %v467, %v459
    %v652 = vpack.c.b16 %v476, %v468
    %v653 = vpack.c.b16 %v477, %v469
    %v654 = vpack.c.b16 %v478, %v470
    %v655 = vpack.c.b16 %v479, %v471
    %v656 = vpack.c.b16 %v480, %v472
    %v657 = vpack.c.b16 %v481, %v473
    %v658 = vpack.c.b16 %v482, %v474
    %v659 = vpack.c.b16 %v483, %v475
    %v660 = vpack.c.b16 %v492, %v484
    %v661 = vpack.c.b16 %v493, %v485
    %v662 = vpack.c.b16 %v494, %v486
    %v663 = vpack.c.b16 %v495, %v487
    %v664 = vpack.c.b16 %v496, %v488
    %v665 = vpack.c.b16 %v497, %v489
    %v666 = vpack.c.b16 %v498, %v490
    %v667 = vpack.c.b16 %v499, %v491
    %v668 = vpack.c.b16 %v508, %v500
    %v669 = vpack.c.b16 %v509, %v501
    %v670 = vpack.c.b16 %v510, %v502
    %v671 = vpack.c.b16 %v511, %v503
    %v672 = vpack.c.b16 %v512, %v504
    %v673 = vpack.c.b16 %v513, %v505
    %v674 = vpack.c.b16 %v514, %v506
    %v675 = vpack.c.b16 %v515, %v507
    %v676 = vpack.c.b16 %v524, %v516
    %v677 = vpack.c.b16 %v525, %v517
    %v678 = vpack.c.b16 %v526, %v518
    %v679 = vpack.c.b16 %v527, %v519
    %v680 = vpack.c.b16 %v528, %v520
    %v681 = vpack.c.b16 %v529, %v521
    %v682 = vpack.c.b16 %v530, %v522
    %v683 = vpack.c.b16 %v531, %v523
    %v684 = vpack.c.b16 %v540, %v532
    %v685 = vpack.c.b16 %v541, %v533
    %v686 = vpack.c.b16 %v542, %v534
    %v687 = vpack.c.b16 %v543, %v535
    %v688 = vpack.c.b16 %v544, %v536
    %v689 = vpack.c.b16 %v545, %v537
    %v690 = vpack.c.b16 %v546, %v538
    %v691 = vpack.c.b16 %v547, %v539
    %v692 = vpack.c.b16 %v556, %v548
    %v693 = vpack.c.b16 %v557, %v549
    %v694 = vpack.c.b16 %v558, %v550
    %v695 = vpack.c.b16 %v559, %v551
    %v696 = vpack.c.b16 %v560, %v552
    %v697 = vpack.c.b16 %v561, %v553
    %v698 = vpack.c.b16 %v562, %v554
    %v699 = vpack.c.b16 %v563, %v555
    %v700 = vpack.c.b16 %v572, %v564
    %v701 = vpack.c.b16 %v573, %v565
    %v702 = vpack.c.b16 %v574, %v566
    %v703 = vpack.c.b16 %v575, %v567
    %v704 = vpack.c.b16 %v576, %v568
    %v705 = vpack.c.b16 %v577, %v569
    %v706 = vpack.c.b16 %v578, %v570
    %v707 = vpack.c.b16 %v579, %v571
    %836 = vmatprep.subr.bf16.mxu0 %v581
    %837 = vmatpush1.bf16.msra.mxu0 %v580
    %838 = vmatprep.subr.bf16.mxu0 %v589
    %839 = vmatpush1.bf16.msra.mxu0 %v588
    %840 = vmatprep.subr.bf16.mxu0 %v597
    %841 = vmatpush1.bf16.msra.mxu0 %v596
    %842 = vmatprep.subr.bf16.mxu0 %v605
    %843 = vmatpush1.bf16.msra.mxu0 %v604
    %844 = vmatprep.subr.bf16.mxu0 %v613
    %845 = vmatpush1.bf16.msra.mxu0 %v612
    %846 = vmatprep.subr.bf16.mxu0 %v621
    %847 = vmatpush1.bf16.msra.mxu0 %v620
    %848 = vmatprep.subr.bf16.mxu0 %v629
    %849 = vmatpush1.bf16.msra.mxu0 %v628
    %850 = vmatprep.subr.bf16.mxu0 %v637
    %851 = vmatpush1.bf16.msra.mxu0 %v636
    %852 = vmatprep.subr.bf16.mxu0 %v645
    %853 = vmatpush1.bf16.msra.mxu0 %v644
    %854 = vmatprep.subr.bf16.mxu0 %v653
    %855 = vmatpush1.bf16.msra.mxu0 %v652
    %856 = vmatprep.subr.bf16.mxu0 %v661
    %857 = vmatpush1.bf16.msra.mxu0 %v660
    %858 = vmatprep.subr.bf16.mxu0 %v669
    %859 = vmatpush1.bf16.msra.mxu0 %v668
    %860 = vmatprep.subr.bf16.mxu0 %v677
    %861 = vmatpush1.bf16.msra.mxu0 %v676
    %862 = vmatprep.subr.bf16.mxu0 %v685
    %863 = vmatpush1.bf16.msra.mxu0 %v684
    %864 = vmatprep.subr.bf16.mxu0 %v693
    %865 = vmatpush1.bf16.msra.mxu0 %v692
    %866 = vmatprep.subr.bf16.mxu0 %v701
    %867 = vmatpush1.bf16.msra.mxu0 %v700
    %868 = vmatprep.mubr.bf16.mxu0 %v193
    %869 = vmatmul.mubr.bf16.gmra.mrb[0].mxu0 %v192
    %v870 = vpop.f32.mrb[0].mxu0
    %v871 = vadd.f32 0.0, %v870
    %v872 = vpop.f32.mrb[0].mxu0
    %v873 = vadd.f32 0.0, %v872
    %v874 = vpop.f32.mrb[0].mxu0
    %v875 = vadd.f32 0.0, %v874
    %v876 = vpop.f32.mrb[0].mxu0
    %v877 = vadd.f32 0.0, %v876
    %878 = vdwg.mxu0
    %879 = vmatprep.subr.bf16.mxu0 %v583
    %880 = vmatpush1.bf16.msra.mxu0 %v582
    %881 = vmatprep.subr.bf16.mxu0 %v591
    %882 = vmatpush1.bf16.msra.mxu0 %v590
    %883 = vmatprep.subr.bf16.mxu0 %v599
    %884 = vmatpush1.bf16.msra.mxu0 %v598
    %885 = vmatprep.subr.bf16.mxu0 %v607
    %886 = vmatpush1.bf16.msra.mxu0 %v606
    %887 = vmatprep.subr.bf16.mxu0 %v615
    %888 = vmatpush1.bf16.msra.mxu0 %v614
    %889 = vmatprep.subr.bf16.mxu0 %v623
    %890 = vmatpush1.bf16.msra.mxu0 %v622
    %891 = vmatprep.subr.bf16.mxu0 %v631
    %892 = vmatpush1.bf16.msra.mxu0 %v630
    %893 = vmatprep.subr.bf16.mxu0 %v639
    %894 = vmatpush1.bf16.msra.mxu0 %v638
    %895 = vmatprep.subr.bf16.mxu0 %v647
    %896 = vmatpush1.bf16.msra.mxu0 %v646
    %897 = vmatprep.subr.bf16.mxu0 %v655
    %898 = vmatpush1.bf16.msra.mxu0 %v654
    %899 = vmatprep.subr.bf16.mxu0 %v663
    %900 = vmatpush1.bf16.msra.mxu0 %v662
    %901 = vmatprep.subr.bf16.mxu0 %v671
    %902 = vmatpush1.bf16.msra.mxu0 %v670
    %903 = vmatprep.subr.bf16.mxu0 %v679
    %904 = vmatpush1.bf16.msra.mxu0 %v678
    %905 = vmatprep.subr.bf16.mxu0 %v687
    %906 = vmatpush1.bf16.msra.mxu0 %v686
    %907 = vmatprep.subr.bf16.mxu0 %v695
    %908 = vmatpush1.bf16.msra.mxu0 %v694
    %909 = vmatprep.subr.bf16.mxu0 %v703
    %910 = vmatpush1.bf16.msra.mxu0 %v702
    %911 = vmatprep.mubr.bf16.mxu0 %v193
    %912 = vmatmul.mubr.bf16.gmra.mrb[0].mxu0 %v192
    %v913 = vpop.f32.mrb[0].mxu0
    %v914 = vadd.f32 0.0, %v913
    %v915 = vpop.f32.mrb[0].mxu0
    %v916 = vadd.f32 0.0, %v915
    %v917 = vpop.f32.mrb[0].mxu0
    %v918 = vadd.f32 0.0, %v917
    %v919 = vpop.f32.mrb[0].mxu0
    %v920 = vadd.f32 0.0, %v919
    %921 = vdwg.mxu0
    %922 = vmatprep.subr.bf16.mxu0 %v585
    %923 = vmatpush1.bf16.msra.mxu0 %v584
    %924 = vmatprep.subr.bf16.mxu0 %v593
    %925 = vmatpush1.bf16.msra.mxu0 %v592
    %926 = vmatprep.subr.bf16.mxu0 %v601
    %927 = vmatpush1.bf16.msra.mxu0 %v600
    %928 = vmatprep.subr.bf16.mxu0 %v609
    %929 = vmatpush1.bf16.msra.mxu0 %v608
    %930 = vmatprep.subr.bf16.mxu0 %v617
    %931 = vmatpush1.bf16.msra.mxu0 %v616
    %932 = vmatprep.subr.bf16.mxu0 %v625
    %933 = vmatpush1.bf16.msra.mxu0 %v624
    %934 = vmatprep.subr.bf16.mxu0 %v633
    %935 = vmatpush1.bf16.msra.mxu0 %v632
    %936 = vmatprep.subr.bf16.mxu0 %v641
    %937 = vmatpush1.bf16.msra.mxu0 %v640
    %938 = vmatprep.subr.bf16.mxu0 %v649
    %939 = vmatpush1.bf16.msra.mxu0 %v648
    %940 = vmatprep.subr.bf16.mxu0 %v657
    %941 = vmatpush1.bf16.msra.mxu0 %v656
    %942 = vmatprep.subr.bf16.mxu0 %v665
    %943 = vmatpush1.bf16.msra.mxu0 %v664
    %944 = vmatprep.subr.bf16.mxu0 %v673
    %945 = vmatpush1.bf16.msra.mxu0 %v672
    %946 = vmatprep.subr.bf16.mxu0 %v681
    %947 = vmatpush1.bf16.msra.mxu0 %v680
    %948 = vmatprep.subr.bf16.mxu0 %v689
    %949 = vmatpush1.bf16.msra.mxu0 %v688
    %950 = vmatprep.subr.bf16.mxu0 %v697
    %951 = vmatpush1.bf16.msra.mxu0 %v696
    %952 = vmatprep.subr.bf16.mxu0 %v705
    %953 = vmatpush1.bf16.msra.mxu0 %v704
    %954 = vmatprep.mubr.bf16.mxu0 %v193
    %955 = vmatmul.mubr.bf16.gmra.mrb[0].mxu0 %v192
    %v956 = vpop.f32.mrb[0].mxu0
    %v957 = vadd.f32 0.0, %v956
    %v958 = vpop.f32.mrb[0].mxu0
    %v959 = vadd.f32 0.0, %v958
    %v960 = vpop.f32.mrb[0].mxu0
    %v961 = vadd.f32 0.0, %v960
    %v962 = vpop.f32.mrb[0].mxu0
    %v963 = vadd.f32 0.0, %v962
    %964 = vdwg.mxu0
    %965 = vmatprep.subr.bf16.mxu0 %v587
    %966 = vmatpush1.bf16.msra.mxu0 %v586
    %967 = vmatprep.subr.bf16.mxu0 %v595
    %968 = vmatpush1.bf16.msra.mxu0 %v594
    %969 = vmatprep.subr.bf16.mxu0 %v603
    %970 = vmatpush1.bf16.msra.mxu0 %v602
    %971 = vmatprep.subr.bf16.mxu0 %v611
    %972 = vmatpush1.bf16.msra.mxu0 %v610
    %973 = vmatprep.subr.bf16.mxu0 %v619
    %974 = vmatpush1.bf16.msra.mxu0 %v618
    %975 = vmatprep.subr.bf16.mxu0 %v627
    %976 = vmatpush1.bf16.msra.mxu0 %v626
    %977 = vmatprep.subr.bf16.mxu0 %v635
    %978 = vmatpush1.bf16.msra.mxu0 %v634
    %979 = vmatprep.subr.bf16.mxu0 %v643
    %980 = vmatpush1.bf16.msra.mxu0 %v642
    %981 = vmatprep.subr.bf16.mxu0 %v651
    %982 = vmatpush1.bf16.msra.mxu0 %v650
    %983 = vmatprep.subr.bf16.mxu0 %v659
    %984 = vmatpush1.bf16.msra.mxu0 %v658
    %985 = vmatprep.subr.bf16.mxu0 %v667
    %986 = vmatpush1.bf16.msra.mxu0 %v666
    %987 = vmatprep.subr.bf16.mxu0 %v675
    %988 = vmatpush1.bf16.msra.mxu0 %v674
    %989 = vmatprep.subr.bf16.mxu0 %v683
    %990 = vmatpush1.bf16.msra.mxu0 %v682
    %991 = vmatprep.subr.bf16.mxu0 %v691
    %992 = vmatpush1.bf16.msra.mxu0 %v690
    %993 = vmatprep.subr.bf16.mxu0 %v699
    %994 = vmatpush1.bf16.msra.mxu0 %v698
    %995 = vmatprep.subr.bf16.mxu0 %v707
    %996 = vmatpush1.bf16.msra.mxu0 %v706
    %997 = vmatprep.mubr.bf16.mxu0 %v193
    %998 = vmatmul.mubr.bf16.gmra.mrb[0].mxu0 %v192
    %v999 = vpop.f32.mrb[0].mxu0
    %v1000 = vadd.f32 0.0, %v999
    %v1001 = vpop.f32.mrb[0].mxu0
    %v1002 = vadd.f32 0.0, %v1001
    %v1003 = vpop.f32.mrb[0].mxu0
    %v1004 = vadd.f32 0.0, %v1003
    %v1005 = vpop.f32.mrb[0].mxu0
    %v1006 = vadd.f32 0.0, %v1005
    %1007 = vdwg.mxu0
    %v1008 = vxor.u32 %v871, 2147483648
    %v1009 = vxor.u32 %v873, 2147483648
    %v1010 = vxor.u32 %v914, 2147483648
    %v1011 = vxor.u32 %v916, 2147483648
    %v1012 = vxor.u32 %v875, 2147483648
    %v1013 = vxor.u32 %v877, 2147483648
    %v1014 = vxor.u32 %v918, 2147483648
    %v1015 = vxor.u32 %v920, 2147483648
    %v1016 = vmul.f32 %v1008, 1.442695
    %v1017 = vpow.pop %v1016
    %v1018 = vmul.f32 %v1009, 1.442695
    %v1019 = vpow.pop %v1018
    %v1020 = vmul.f32 %v1010, 1.442695
    %v1021 = vpow.pop %v1020
    %v1022 = vmul.f32 %v1011, 1.442695
    %v1023 = vpow.pop %v1022
    %v1024 = vmul.f32 %v1012, 1.442695
    %v1025 = vpow.pop %v1024
    %v1026 = vmul.f32 %v1013, 1.442695
    %v1027 = vpow.pop %v1026
    %v1028 = vmul.f32 %v1014, 1.442695
    %v1029 = vpow.pop %v1028
    %v1030 = vmul.f32 %v1015, 1.442695
    %v1031 = vpow.pop %v1030
    %v1032 = vadd.f32 %v1017, 1.0
    %v1033 = vadd.f32 %v1019, 1.0
    %v1034 = vadd.f32 %v1021, 1.0
    %v1035 = vadd.f32 %v1023, 1.0
    %v1036 = vadd.f32 %v1025, 1.0
    %v1037 = vadd.f32 %v1027, 1.0
    %v1038 = vadd.f32 %v1029, 1.0
    %v1039 = vadd.f32 %v1031, 1.0
    %v1040 = vrcp.pop %v1032
    %v1041 = vmul.f32 1.0, %v1040
    %v1042 = vrcp.pop %v1033
    %v1043 = vmul.f32 1.0, %v1042
    %v1044 = vrcp.pop %v1034
    %v1045 = vmul.f32 1.0, %v1044
    %v1046 = vrcp.pop %v1035
    %v1047 = vmul.f32 1.0, %v1046
    %v1048 = vrcp.pop %v1036
    %v1049 = vmul.f32 1.0, %v1048
    %v1050 = vrcp.pop %v1037
    %v1051 = vmul.f32 1.0, %v1050
    %v1052 = vrcp.pop %v1038
    %v1053 = vmul.f32 1.0, %v1052
    %v1054 = vrcp.pop %v1039
    %v1055 = vmul.f32 1.0, %v1054
    %v1056 = vmul.f32 %v871, %v1041
    %v1057 = vmul.f32 %v873, %v1043
    %v1058 = vmul.f32 %v914, %v1045
    %v1059 = vmul.f32 %v916, %v1047
    %v1060 = vmul.f32 %v875, %v1049
    %v1061 = vmul.f32 %v877, %v1051
    %v1062 = vmul.f32 %v918, %v1053
    %v1063 = vmul.f32 %v920, %v1055
    %v1064 = vmul.f32 %v1056, %v957
    %v1065 = vmul.f32 %v1057, %v959
    %v1066 = vmul.f32 %v1058, %v1000
    %v1067 = vmul.f32 %v1059, %v1002
    %v1068 = vmul.f32 %v1060, %v961
    %v1069 = vmul.f32 %v1061, %v963
    %v1070 = vmul.f32 %v1062, %v1004
    %v1071 = vmul.f32 %v1063, %v1006
    %v1072 = vpack.c.bf16 %v1068, %v1064
    %v1073 = vpack.c.bf16 %v1069, %v1065
    %v1074 = vpack.c.bf16 %v1070, %v1066
    %v1075 = vpack.c.bf16 %v1071, %v1067
    %v1076 = vld [vmem:[#allocation8] sm:$0xff]
    %v1077 = vld [vmem:[#allocation8 + $0x8] sm:$0xff]
    %v1078 = vld [vmem:[#allocation8 + $0x10] sm:$0xff]
    %v1079 = vld [vmem:[#allocation8 + $0x18] sm:$0xff]
    %v1080 = vld [vmem:[#allocation8 + $0x20] sm:$0xff]
    %v1081 = vld [vmem:[#allocation8 + $0x28] sm:$0xff]
    %v1082 = vld [vmem:[#allocation8 + $0x30] sm:$0xff]
    %v1083 = vld [vmem:[#allocation8 + $0x38] sm:$0xff]
    %v1084 = vld [vmem:[#allocation8 + $0x40] sm:$0xff]
    %v1085 = vld [vmem:[#allocation8 + $0x48] sm:$0xff]
    %v1086 = vld [vmem:[#allocation8 + $0x50] sm:$0xff]
    %v1087 = vld [vmem:[#allocation8 + $0x58] sm:$0xff]
    %v1088 = vld [vmem:[#allocation8 + $0x60] sm:$0xff]
    %v1089 = vld [vmem:[#allocation8 + $0x68] sm:$0xff]
    %v1090 = vld [vmem:[#allocation8 + $0x70] sm:$0xff]
    %v1091 = vld [vmem:[#allocation8 + $0x78] sm:$0xff]
    %v1092 = vld [vmem:[#allocation8 + $0x80] sm:$0xff]
    %v1093 = vld [vmem:[#allocation8 + $0x88] sm:$0xff]
    %v1094 = vld [vmem:[#allocation8 + $0x90] sm:$0xff]
    %v1095 = vld [vmem:[#allocation8 + $0x98] sm:$0xff]
    %v1096 = vld [vmem:[#allocation8 + $0xa0] sm:$0xff]
    %v1097 = vld [vmem:[#allocation8 + $0xa8] sm:$0xff]
    %v1098 = vld [vmem:[#allocation8 + $0xb0] sm:$0xff]
    %v1099 = vld [vmem:[#allocation8 + $0xb8] sm:$0xff]
    %v1100 = vld [vmem:[#allocation8 + $0xc0] sm:$0xff]
    %v1101 = vld [vmem:[#allocation8 + $0xc8] sm:$0xff]
    %v1102 = vld [vmem:[#allocation8 + $0xd0] sm:$0xff]
    %v1103 = vld [vmem:[#allocation8 + $0xd8] sm:$0xff]
    %v1104 = vld [vmem:[#allocation8 + $0xe0] sm:$0xff]
    %v1105 = vld [vmem:[#allocation8 + $0xe8] sm:$0xff]
    %v1106 = vld [vmem:[#allocation8 + $0xf0] sm:$0xff]
    %v1107 = vld [vmem:[#allocation8 + $0xf8] sm:$0xff]
    %v1108 = vld [vmem:[#allocation8 + $0x100] sm:$0xff]
    %v1109 = vld [vmem:[#allocation8 + $0x108] sm:$0xff]
    %v1110 = vld [vmem:[#allocation8 + $0x110] sm:$0xff]
    %v1111 = vld [vmem:[#allocation8 + $0x118] sm:$0xff]
    %v1112 = vld [vmem:[#allocation8 + $0x120] sm:$0xff]
    %v1113 = vld [vmem:[#allocation8 + $0x128] sm:$0xff]
    %v1114 = vld [vmem:[#allocation8 + $0x130] sm:$0xff]
    %v1115 = vld [vmem:[#allocation8 + $0x138] sm:$0xff]
    %v1116 = vld [vmem:[#allocation8 + $0x140] sm:$0xff]
    %v1117 = vld [vmem:[#allocation8 + $0x148] sm:$0xff]
    %v1118 = vld [vmem:[#allocation8 + $0x150] sm:$0xff]
    %v1119 = vld [vmem:[#allocation8 + $0x158] sm:$0xff]
    %v1120 = vld [vmem:[#allocation8 + $0x160] sm:$0xff]
    %v1121 = vld [vmem:[#allocation8 + $0x168] sm:$0xff]
    %v1122 = vld [vmem:[#allocation8 + $0x170] sm:$0xff]
    %v1123 = vld [vmem:[#allocation8 + $0x178] sm:$0xff]
    %v1124 = vld [vmem:[#allocation8 + $0x180] sm:$0xff]
    %v1125 = vld [vmem:[#allocation8 + $0x188] sm:$0xff]
    %v1126 = vld [vmem:[#allocation8 + $0x190] sm:$0xff]
    %v1127 = vld [vmem:[#allocation8 + $0x198] sm:$0xff]
    %v1128 = vld [vmem:[#allocation8 + $0x1a0] sm:$0xff]
    %v1129 = vld [vmem:[#allocation8 + $0x1a8] sm:$0xff]
    %v1130 = vld [vmem:[#allocation8 + $0x1b0] sm:$0xff]
    %v1131 = vld [vmem:[#allocation8 + $0x1b8] sm:$0xff]
    %v1132 = vld [vmem:[#allocation8 + $0x1c0] sm:$0xff]
    %v1133 = vld [vmem:[#allocation8 + $0x1c8] sm:$0xff]
    %v1134 = vld [vmem:[#allocation8 + $0x1d0] sm:$0xff]
    %v1135 = vld [vmem:[#allocation8 + $0x1d8] sm:$0xff]
    %v1136 = vld [vmem:[#allocation8 + $0x1e0] sm:$0xff]
    %v1137 = vld [vmem:[#allocation8 + $0x1e8] sm:$0xff]
    %v1138 = vld [vmem:[#allocation8 + $0x1f0] sm:$0xff]
    %v1139 = vld [vmem:[#allocation8 + $0x1f8] sm:$0xff]
    %v1204 = vunpack.c.l.b16 %v1076
    %v1205 = vunpack.c.h.b16 %v1076
    %v1206 = vunpack.c.l.b16 %v1077
    %v1207 = vunpack.c.h.b16 %v1077
    %v1208 = vunpack.c.l.b16 %v1078
    %v1209 = vunpack.c.h.b16 %v1078
    %v1210 = vunpack.c.l.b16 %v1079
    %v1211 = vunpack.c.h.b16 %v1079
    %v1212 = vunpack.c.l.b16 %v1080
    %v1213 = vunpack.c.h.b16 %v1080
    %v1214 = vunpack.c.l.b16 %v1081
    %v1215 = vunpack.c.h.b16 %v1081
    %v1216 = vunpack.c.l.b16 %v1082
    %v1217 = vunpack.c.h.b16 %v1082
    %v1218 = vunpack.c.l.b16 %v1083
    %v1219 = vunpack.c.h.b16 %v1083
    %v1220 = vunpack.c.l.b16 %v1084
    %v1221 = vunpack.c.h.b16 %v1084
    %v1222 = vunpack.c.l.b16 %v1085
    %v1223 = vunpack.c.h.b16 %v1085
    %v1224 = vunpack.c.l.b16 %v1086
    %v1225 = vunpack.c.h.b16 %v1086
    %v1226 = vunpack.c.l.b16 %v1087
    %v1227 = vunpack.c.h.b16 %v1087
    %v1228 = vunpack.c.l.b16 %v1088
    %v1229 = vunpack.c.h.b16 %v1088
    %v1230 = vunpack.c.l.b16 %v1089
    %v1231 = vunpack.c.h.b16 %v1089
    %v1232 = vunpack.c.l.b16 %v1090
    %v1233 = vunpack.c.h.b16 %v1090
    %v1234 = vunpack.c.l.b16 %v1091
    %v1235 = vunpack.c.h.b16 %v1091
    %v1236 = vunpack.c.l.b16 %v1092
    %v1237 = vunpack.c.h.b16 %v1092
    %v1238 = vunpack.c.l.b16 %v1093
    %v1239 = vunpack.c.h.b16 %v1093
    %v1240 = vunpack.c.l.b16 %v1094
    %v1241 = vunpack.c.h.b16 %v1094
    %v1242 = vunpack.c.l.b16 %v1095
    %v1243 = vunpack.c.h.b16 %v1095
    %v1244 = vunpack.c.l.b16 %v1096
    %v1245 = vunpack.c.h.b16 %v1096
    %v1246 = vunpack.c.l.b16 %v1097
    %v1247 = vunpack.c.h.b16 %v1097
    %v1248 = vunpack.c.l.b16 %v1098
    %v1249 = vunpack.c.h.b16 %v1098
    %v1250 = vunpack.c.l.b16 %v1099
    %v1251 = vunpack.c.h.b16 %v1099
    %v1252 = vunpack.c.l.b16 %v1100
    %v1253 = vunpack.c.h.b16 %v1100
    %v1254 = vunpack.c.l.b16 %v1101
    %v1255 = vunpack.c.h.b16 %v1101
    %v1256 = vunpack.c.l.b16 %v1102
    %v1257 = vunpack.c.h.b16 %v1102
    %v1258 = vunpack.c.l.b16 %v1103
    %v1259 = vunpack.c.h.b16 %v1103
    %v1260 = vunpack.c.l.b16 %v1104
    %v1261 = vunpack.c.h.b16 %v1104
    %v1262 = vunpack.c.l.b16 %v1105
    %v1263 = vunpack.c.h.b16 %v1105
    %v1264 = vunpack.c.l.b16 %v1106
    %v1265 = vunpack.c.h.b16 %v1106
    %v1266 = vunpack.c.l.b16 %v1107
    %v1267 = vunpack.c.h.b16 %v1107
    %v1268 = vunpack.c.l.b16 %v1108
    %v1269 = vunpack.c.h.b16 %v1108
    %v1270 = vunpack.c.l.b16 %v1109
    %v1271 = vunpack.c.h.b16 %v1109
    %v1272 = vunpack.c.l.b16 %v1110
    %v1273 = vunpack.c.h.b16 %v1110
    %v1274 = vunpack.c.l.b16 %v1111
    %v1275 = vunpack.c.h.b16 %v1111
    %v1276 = vunpack.c.l.b16 %v1112
    %v1277 = vunpack.c.h.b16 %v1112
    %v1278 = vunpack.c.l.b16 %v1113
    %v1279 = vunpack.c.h.b16 %v1113
    %v1280 = vunpack.c.l.b16 %v1114
    %v1281 = vunpack.c.h.b16 %v1114
    %v1282 = vunpack.c.l.b16 %v1115
    %v1283 = vunpack.c.h.b16 %v1115
    %v1284 = vunpack.c.l.b16 %v1116
    %v1285 = vunpack.c.h.b16 %v1116
    %v1286 = vunpack.c.l.b16 %v1117
    %v1287 = vunpack.c.h.b16 %v1117
    %v1288 = vunpack.c.l.b16 %v1118
    %v1289 = vunpack.c.h.b16 %v1118
    %v1290 = vunpack.c.l.b16 %v1119
    %v1291 = vunpack.c.h.b16 %v1119
    %v1292 = vunpack.c.l.b16 %v1120
    %v1293 = vunpack.c.h.b16 %v1120
    %v1294 = vunpack.c.l.b16 %v1121
    %v1295 = vunpack.c.h.b16 %v1121
    %v1296 = vunpack.c.l.b16 %v1122
    %v1297 = vunpack.c.h.b16 %v1122
    %v1298 = vunpack.c.l.b16 %v1123
    %v1299 = vunpack.c.h.b16 %v1123
    %v1300 = vunpack.c.l.b16 %v1124
    %v1301 = vunpack.c.h.b16 %v1124
    %v1302 = vunpack.c.l.b16 %v1125
    %v1303 = vunpack.c.h.b16 %v1125
    %v1304 = vunpack.c.l.b16 %v1126
    %v1305 = vunpack.c.h.b16 %v1126
    %v1306 = vunpack.c.l.b16 %v1127
    %v1307 = vunpack.c.h.b16 %v1127
    %v1308 = vunpack.c.l.b16 %v1128
    %v1309 = vunpack.c.h.b16 %v1128
    %v1310 = vunpack.c.l.b16 %v1129
    %v1311 = vunpack.c.h.b16 %v1129
    %v1312 = vunpack.c.l.b16 %v1130
    %v1313 = vunpack.c.h.b16 %v1130
    %v1314 = vunpack.c.l.b16 %v1131
    %v1315 = vunpack.c.h.b16 %v1131
    %v1316 = vunpack.c.l.b16 %v1132
    %v1317 = vunpack.c.h.b16 %v1132
    %v1318 = vunpack.c.l.b16 %v1133
    %v1319 = vunpack.c.h.b16 %v1133
    %v1320 = vunpack.c.l.b16 %v1134
    %v1321 = vunpack.c.h.b16 %v1134
    %v1322 = vunpack.c.l.b16 %v1135
    %v1323 = vunpack.c.h.b16 %v1135
    %v1324 = vunpack.c.l.b16 %v1136
    %v1325 = vunpack.c.h.b16 %v1136
    %v1326 = vunpack.c.l.b16 %v1137
    %v1327 = vunpack.c.h.b16 %v1137
    %v1328 = vunpack.c.l.b16 %v1138
    %v1329 = vunpack.c.h.b16 %v1138
    %v1330 = vunpack.c.l.b16 %v1139
    %v1331 = vunpack.c.h.b16 %v1139
    %v1332 = vpack.c.b16 %v1206, %v1204
    %v1333 = vpack.c.b16 %v1207, %v1205
    %v1334 = vpack.c.b16 %v1210, %v1208
    %v1335 = vpack.c.b16 %v1211, %v1209
    %v1336 = vpack.c.b16 %v1214, %v1212
    %v1337 = vpack.c.b16 %v1215, %v1213
    %v1338 = vpack.c.b16 %v1218, %v1216
    %v1339 = vpack.c.b16 %v1219, %v1217
    %v1340 = vpack.c.b16 %v1222, %v1220
    %v1341 = vpack.c.b16 %v1223, %v1221
    %v1342 = vpack.c.b16 %v1226, %v1224
    %v1343 = vpack.c.b16 %v1227, %v1225
    %v1344 = vpack.c.b16 %v1230, %v1228
    %v1345 = vpack.c.b16 %v1231, %v1229
    %v1346 = vpack.c.b16 %v1234, %v1232
    %v1347 = vpack.c.b16 %v1235, %v1233
    %v1348 = vpack.c.b16 %v1238, %v1236
    %v1349 = vpack.c.b16 %v1239, %v1237
    %v1350 = vpack.c.b16 %v1242, %v1240
    %v1351 = vpack.c.b16 %v1243, %v1241
    %v1352 = vpack.c.b16 %v1246, %v1244
    %v1353 = vpack.c.b16 %v1247, %v1245
    %v1354 = vpack.c.b16 %v1250, %v1248
    %v1355 = vpack.c.b16 %v1251, %v1249
    %v1356 = vpack.c.b16 %v1254, %v1252
    %v1357 = vpack.c.b16 %v1255, %v1253
    %v1358 = vpack.c.b16 %v1258, %v1256
    %v1359 = vpack.c.b16 %v1259, %v1257
    %v1360 = vpack.c.b16 %v1262, %v1260
    %v1361 = vpack.c.b16 %v1263, %v1261
    %v1362 = vpack.c.b16 %v1266, %v1264
    %v1363 = vpack.c.b16 %v1267, %v1265
    %v1364 = vpack.c.b16 %v1270, %v1268
    %v1365 = vpack.c.b16 %v1271, %v1269
    %v1366 = vpack.c.b16 %v1274, %v1272
    %v1367 = vpack.c.b16 %v1275, %v1273
    %v1368 = vpack.c.b16 %v1278, %v1276
    %v1369 = vpack.c.b16 %v1279, %v1277
    %v1370 = vpack.c.b16 %v1282, %v1280
    %v1371 = vpack.c.b16 %v1283, %v1281
    %v1372 = vpack.c.b16 %v1286, %v1284
    %v1373 = vpack.c.b16 %v1287, %v1285
    %v1374 = vpack.c.b16 %v1290, %v1288
    %v1375 = vpack.c.b16 %v1291, %v1289
    %v1376 = vpack.c.b16 %v1294, %v1292
    %v1377 = vpack.c.b16 %v1295, %v1293
    %v1378 = vpack.c.b16 %v1298, %v1296
    %v1379 = vpack.c.b16 %v1299, %v1297
    %v1380 = vpack.c.b16 %v1302, %v1300
    %v1381 = vpack.c.b16 %v1303, %v1301
    %v1382 = vpack.c.b16 %v1306, %v1304
    %v1383 = vpack.c.b16 %v1307, %v1305
    %v1384 = vpack.c.b16 %v1310, %v1308
    %v1385 = vpack.c.b16 %v1311, %v1309
    %v1386 = vpack.c.b16 %v1314, %v1312
    %v1387 = vpack.c.b16 %v1315, %v1313
    %v1388 = vpack.c.b16 %v1318, %v1316
    %v1389 = vpack.c.b16 %v1319, %v1317
    %v1390 = vpack.c.b16 %v1322, %v1320
    %v1391 = vpack.c.b16 %v1323, %v1321
    %v1392 = vpack.c.b16 %v1326, %v1324
    %v1393 = vpack.c.b16 %v1327, %v1325
    %v1394 = vpack.c.b16 %v1330, %v1328
    %v1395 = vpack.c.b16 %v1331, %v1329
    %1460 = vmatprep.subr.bf16.mxu0 %v1333
    %1461 = vmatpush1.bf16.msra.mxu0 %v1332
    %1462 = vmatprep.subr.bf16.mxu0 %v1335
    %1463 = vmatpush1.bf16.msra.mxu0 %v1334
    %1464 = vmatprep.subr.bf16.mxu0 %v1337
    %1465 = vmatpush1.bf16.msra.mxu0 %v1336
    %1466 = vmatprep.subr.bf16.mxu0 %v1339
    %1467 = vmatpush1.bf16.msra.mxu0 %v1338
    %1468 = vmatprep.subr.bf16.mxu0 %v1341
    %1469 = vmatpush1.bf16.msra.mxu0 %v1340
    %1470 = vmatprep.subr.bf16.mxu0 %v1343
    %1471 = vmatpush1.bf16.msra.mxu0 %v1342
    %1472 = vmatprep.subr.bf16.mxu0 %v1345
    %1473 = vmatpush1.bf16.msra.mxu0 %v1344
    %1474 = vmatprep.subr.bf16.mxu0 %v1347
    %1475 = vmatpush1.bf16.msra.mxu0 %v1346
    %1476 = vmatprep.subr.bf16.mxu0 %v1349
    %1477 = vmatpush1.bf16.msra.mxu0 %v1348
    %1478 = vmatprep.subr.bf16.mxu0 %v1351
    %1479 = vmatpush1.bf16.msra.mxu0 %v1350
    %1480 = vmatprep.subr.bf16.mxu0 %v1353
    %1481 = vmatpush1.bf16.msra.mxu0 %v1352
    %1482 = vmatprep.subr.bf16.mxu0 %v1355
    %1483 = vmatpush1.bf16.msra.mxu0 %v1354
    %1484 = vmatprep.subr.bf16.mxu0 %v1357
    %1485 = vmatpush1.bf16.msra.mxu0 %v1356
    %1486 = vmatprep.subr.bf16.mxu0 %v1359
    %1487 = vmatpush1.bf16.msra.mxu0 %v1358
    %1488 = vmatprep.subr.bf16.mxu0 %v1361
    %1489 = vmatpush1.bf16.msra.mxu0 %v1360
    %1490 = vmatprep.subr.bf16.mxu0 %v1363
    %1491 = vmatpush1.bf16.msra.mxu0 %v1362
    %1492 = vmatprep.mubr.bf16.mxu0 %v1073
    %1493 = vmatmul.mubr.bf16.gmra.mrb[0].mxu0 %v1072
    %v1494 = vpop.f32.mrb[0].mxu0
    %v1495 = vadd.f32 0.0, %v1494
    %v1496 = vpop.f32.mrb[0].mxu0
    %v1497 = vadd.f32 0.0, %v1496
    %v1498 = vpop.f32.mrb[0].mxu0
    %v1499 = vadd.f32 0.0, %v1498
    %v1500 = vpop.f32.mrb[0].mxu0
    %v1501 = vadd.f32 0.0, %v1500
    %1502 = vdwg.mxu0
    %1503 = vmatprep.subr.bf16.mxu0 %v1365
    %1504 = vmatpush1.bf16.msra.mxu0 %v1364
    %1505 = vmatprep.subr.bf16.mxu0 %v1367
    %1506 = vmatpush1.bf16.msra.mxu0 %v1366
    %1507 = vmatprep.subr.bf16.mxu0 %v1369
    %1508 = vmatpush1.bf16.msra.mxu0 %v1368
    %1509 = vmatprep.subr.bf16.mxu0 %v1371
    %1510 = vmatpush1.bf16.msra.mxu0 %v1370
    %1511 = vmatprep.subr.bf16.mxu0 %v1373
    %1512 = vmatpush1.bf16.msra.mxu0 %v1372
    %1513 = vmatprep.subr.bf16.mxu0 %v1375
    %1514 = vmatpush1.bf16.msra.mxu0 %v1374
    %1515 = vmatprep.subr.bf16.mxu0 %v1377
    %1516 = vmatpush1.bf16.msra.mxu0 %v1376
    %1517 = vmatprep.subr.bf16.mxu0 %v1379
    %1518 = vmatpush1.bf16.msra.mxu0 %v1378
    %1519 = vmatprep.subr.bf16.mxu0 %v1381
    %1520 = vmatpush1.bf16.msra.mxu0 %v1380
    %1521 = vmatprep.subr.bf16.mxu0 %v1383
    %1522 = vmatpush1.bf16.msra.mxu0 %v1382
    %1523 = vmatprep.subr.bf16.mxu0 %v1385
    %1524 = vmatpush1.bf16.msra.mxu0 %v1384
    %1525 = vmatprep.subr.bf16.mxu0 %v1387
    %1526 = vmatpush1.bf16.msra.mxu0 %v1386
    %1527 = vmatprep.subr.bf16.mxu0 %v1389
    %1528 = vmatpush1.bf16.msra.mxu0 %v1388
    %1529 = vmatprep.subr.bf16.mxu0 %v1391
    %1530 = vmatpush1.bf16.msra.mxu0 %v1390
    %1531 = vmatprep.subr.bf16.mxu0 %v1393
    %1532 = vmatpush1.bf16.msra.mxu0 %v1392
    %1533 = vmatprep.subr.bf16.mxu0 %v1395
    %1534 = vmatpush1.bf16.msra.mxu0 %v1394
    %1535 = vmatprep.mubr.bf16.mxu0 %v1075
    %1536 = vmatmul.mubr.bf16.gmra.mrb[0].mxu0 %v1074
    %v1537 = vpop.f32.mrb[0].mxu0
    %v1538 = vadd.f32 %v1495, %v1537
    %v1539 = vpop.f32.mrb[0].mxu0
    %v1540 = vadd.f32 %v1497, %v1539
    %v1541 = vpop.f32.mrb[0].mxu0
    %v1542 = vadd.f32 %v1499, %v1541
    %v1543 = vpop.f32.mrb[0].mxu0
    %v1544 = vadd.f32 %v1501, %v1543
    %1545 = vdwg.mxu0
    %p1546 = scmp.eq.s32.totalorder 0, 0
    // Predicated region
    $region26: #{fused_mlp.1} parent=1 // pred_check
      %p1547 = pneg %p1546
    $region27: #{fused_mlp.1} parent=1 // pred_check_branch
      %1549 = sbr.rel (%p1547) target = $region29
    $region28: #{fused_mlp.1} parent=1 // pred_region
      %1550 = vst [vmem:[#allocation2] sm:$0xff] %v1538
      %1551 = vst [vmem:[#allocation2 + $0x8] sm:$0xff] %v1540
      %1552 = vst [vmem:[#allocation2 + $0x10] sm:$0xff] %v1542
      %1553 = vst [vmem:[#allocation2 + $0x18] sm:$0xff] %v1544
    $region29: #{fused_mlp.1} parent=1 // pred_fallthru
      _
    %p1554 = scmp.gt.s32.totalorder 0, 0
    // Predicated region
    $region30: #{fused_mlp.1} parent=1 // pred_check
      %p1555 = pneg %p1554
    $region31: #{fused_mlp.1} parent=1 // pred_check_branch
      %1557 = sbr.rel (%p1555) target = $region33
    $region32: #{fused_mlp.1} parent=1 // pred_region
      %v1558 = vld [vmem:[#allocation2] sm:$0xff]
      %v1559 = vld [vmem:[#allocation2 + $0x8] sm:$0xff]
      %v1560 = vld [vmem:[#allocation2 + $0x10] sm:$0xff]
      %v1561 = vld [vmem:[#allocation2 + $0x18] sm:$0xff]
      %v1562 = vadd.f32 %v1558, %v1538
      %v1563 = vadd.f32 %v1559, %v1540
      %v1564 = vadd.f32 %v1560, %v1542
      %v1565 = vadd.f32 %v1561, %v1544
      %1566 = vst [vmem:[#allocation2] sm:$0xff] %v1562
      %1567 = vst [vmem:[#allocation2 + $0x8] sm:$0xff] %v1563
      %1568 = vst [vmem:[#allocation2 + $0x10] sm:$0xff] %v1564
      %1569 = vst [vmem:[#allocation2 + $0x18] sm:$0xff] %v1565
    $region33: #{fused_mlp.1} parent=1 // pred_fallthru
      _
    // Predicated region
    $region34: #{fused_mlp.1} parent=1 // pred_check
      %p1570 = pneg %p1546
    $region35: #{fused_mlp.1} parent=1 // pred_check_branch
      %1572 = sbr.rel (%p1570) target = $region37
    $region36: #{fused_mlp.1} parent=1 // pred_region
      %v1573 = vld [vmem:[#allocation2] sm:$0xff]
      %v1574 = vld [vmem:[#allocation2 + $0x8] sm:$0xff]
      %v1575 = vld [vmem:[#allocation2 + $0x10] sm:$0xff]
      %v1576 = vld [vmem:[#allocation2 + $0x18] sm:$0xff]
      %v1577 = vpack.c.bf16 %v1575, %v1573
      %v1578 = vpack.c.bf16 %v1576, %v1574
      %v1581 = vunpack.c.l.b16 %v1577
      %v1582 = vunpack.c.l.b16 %v1578
      %v1583 = vunpack.c.h.b16 %v1577
      %v1584 = vunpack.c.h.b16 %v1578
      %v1585 = vpack.c.b16 %v1582, %v1581
      %v1586 = vpack.c.b16 %v1584, %v1583
      %1589 = vst [vmem:[#allocation9] sm:$0xff] %v1585
      %1590 = vst [vmem:[#allocation9 + $0x8] sm:$0xff] %v1586
    $region37: #{fused_mlp.1} parent=1 // pred_fallthru
      _
    // Predicated region
    $region38: #{fused_mlp.1} parent=1 // pred_check
      _
    $region39: #{fused_mlp.1} parent=1 // pred_check_branch
      %1592 = sbr.rel (0) target = $region41
    $region40: #{fused_mlp.1} parent=1 // pred_region
      %s1594 = ssub.s32 256, 256
      %1595 = vsyncadd [#allocation5], %s1594
      %s1596 = sshll.u32 [#allocation9], 4
      %s1597 = int_to_ptr.vmem [resolvable:$true] %s1596
      %1602 = dma.vmem_to_hbm [thread:$0]  %s1597, 256, %s3, [#allocation5], 128, 128, 8
    $region41: #{fused_mlp.1} parent=1 // pred_fallthru
      _
    // Predicated region
    $region42: #{fused_mlp.1} parent=1 // pred_check
      _
    $region43: #{fused_mlp.1} parent=1 // pred_check_branch
      %1604 = sbr.rel (0) target = $region45
    $region44: #{fused_mlp.1} parent=1 // pred_region
      %1605 = dma.done [#allocation5], 256
    $region45: #{fused_mlp.1} parent=1 // pred_fallthru
      _
    %1606 = vsyncpa [#allocation4], 1
    %1607 = vsyncpa [#allocation7], 1
    %1608 = vsyncpa [#allocation5], 1

</llo_original>
